<compile_context>
chip_gen: v7x
topology: tpu7x:2x2x1
jax: 0.10.0
libtpu: 0.0.40
codegen_flags: <defaults>
</compile_context>

<pallas_src>
import jax
import jax.numpy as jnp
from jax.experimental import pallas as pl
from jax.experimental.pallas import tpu as pltpu

LANE = 128
NEG = -1e30  # finite "-inf" used to mask padded vocab columns


def _round_up(x, m):
    return (x + m - 1) // m * m


# ----------------------------------------------------------------------------
# Kernel
# ----------------------------------------------------------------------------
def decoder_rnn_kernel(emb_ref, h_ref, w_ih_ref, w_hh_ref, b_ih_ref, b_hh_ref,
                       w_out_ref, b_out_ref,
                       logp_ref, h_new_ref,
                       h_bf_scr, logits_scr, m_scr, l_scr):
    j = pl.program_id(0)
    nj = pl.num_programs(0)
    Hp = h_ref.shape[1]
    tv = w_out_ref.shape[1]

    # ---- GRU cell: runs once (first V-tile); its weights are VMEM-resident ----
    @pl.when(j == 0)
    def _gru_and_init():
        x = jnp.maximum(emb_ref[...], 0)                       # ReLU(embedding), bf16
        h = h_ref[...]                                          # [1, Hp] f32
        gi = jnp.dot(x, w_ih_ref[...],
                     preferred_element_type=jnp.float32) + b_ih_ref[...]   # [1, 3Hp]
        gh = jnp.dot(h.astype(jnp.bfloat16), w_hh_ref[...],
                     preferred_element_type=jnp.float32) + b_hh_ref[...]   # [1, 3Hp]
        # PyTorch gate order [r, z, n]; slices are 128-lane aligned (Hp % 128 == 0).
        r = jax.nn.sigmoid(gi[:, 0:Hp] + gh[:, 0:Hp])
        z = jax.nn.sigmoid(gi[:, Hp:2 * Hp] + gh[:, Hp:2 * Hp])
        n = jnp.tanh(gi[:, 2 * Hp:3 * Hp] + r * gh[:, 2 * Hp:3 * Hp])
        h_new = (1.0 - z) * n + z * h                           # [1, Hp] f32
        h_new_ref[...] = h_new
        h_bf_scr[...] = h_new.astype(jnp.bfloat16)
        m_scr[...] = jnp.full((1, 1), -jnp.inf, jnp.float32)
        l_scr[...] = jnp.zeros((1, 1), jnp.float32)

    # ---- one lane-dense tile of the output projection + online logsumexp ----
    logits = jnp.dot(h_bf_scr[...], w_out_ref[...],
                     preferred_element_type=jnp.float32) + b_out_ref[...]   # [1, tv]
    logits_scr[j] = logits                                      # keep raw logits

    m_prev = m_scr[...]
    m_new = jnp.maximum(m_prev, jnp.max(logits, axis=1, keepdims=True))
    l_scr[...] = (l_scr[...] * jnp.exp(m_prev - m_new)
                  + jnp.sum(jnp.exp(logits - m_new), axis=1, keepdims=True))
    m_scr[...] = m_new

    # ---- finalize log-softmax on the last tile (output block is resident) ----
    @pl.when(j == nj - 1)
    def _finalize():
        lse = m_scr[...] + jnp.log(l_scr[...])                  # [1, 1]
        for t in range(logits_scr.shape[0]):                    # static unroll over tiles
            logp_ref[:, t * tv:(t + 1) * tv] = logits_scr[t] - lse


# ----------------------------------------------------------------------------
# Parameter preparation (pad to 128-lane multiples, transpose, cast to bf16)
# ----------------------------------------------------------------------------
def init_params(key, hidden_size, output_size):
    """PyTorch-layout fp32 parameters (embedding / nn.GRU / nn.Linear)."""
    ks = jax.random.split(key, 7)
    s = 0.1
    H, V = hidden_size, output_size
    return {
        "embedding": s * jax.random.normal(ks[0], (V, H), jnp.float32),
        "w_ih": s * jax.random.normal(ks[1], (3 * H, H), jnp.float32),  # gates [r; z; n]
        "w_hh": s * jax.random.normal(ks[2], (3 * H, H), jnp.float32),
        "b_ih": s * jax.random.normal(ks[3], (3 * H,), jnp.float32),
        "b_hh": s * jax.random.normal(ks[4], (3 * H,), jnp.float32),
        "w_out": s * jax.random.normal(ks[5], (V, H), jnp.float32),
        "b_out": s * jax.random.normal(ks[6], (V,), jnp.float32),
    }


def prepare_params(raw, tile_v=512):
    V, H = raw["embedding"].shape
    Hp = _round_up(H, LANE)
    tile_v = _round_up(max(tile_v, LANE), LANE)
    Vp = _round_up(V, tile_v)
    assert Vp % tile_v == 0

    def place_gates(w, b):
        # torch (3H, H) row-blocks [r; z; n]  ->  [Hp, 3Hp] with x @ W layout,
        # each gate in its own 128-aligned column slot; padding stays zero.
        wt = jnp.zeros((Hp, 3 * Hp), jnp.float32)
        bt = jnp.zeros((1, 3 * Hp), jnp.float32)
        for g in range(3):
            wt = wt.at[:H, g * Hp:g * Hp + H].set(w[g * H:(g + 1) * H, :].T)
            bt = bt.at[:, g * Hp:g * Hp + H].set(b[g * H:(g + 1) * H][None, :])
        return wt.astype(jnp.bfloat16), bt

    w_ih, b_ih = place_gates(raw["w_ih"], raw["b_ih"])
    w_hh, b_hh = place_gates(raw["w_hh"], raw["b_hh"])

    emb = jnp.zeros((V, Hp), jnp.float32).at[:, :H].set(raw["embedding"])
    emb = emb.astype(jnp.bfloat16)                              # (V, Hp)

    w_out = jnp.zeros((Hp, Vp), jnp.float32).at[:H, :V].set(raw["w_out"].T)
    w_out = w_out.astype(jnp.bfloat16)                          # (Hp, Vp)
    # padded vocab columns get a huge negative bias -> zero softmax mass
    b_out = jnp.full((1, Vp), NEG, jnp.float32).at[:, :V].set(raw["b_out"][None, :])

    return dict(embedding=emb, w_ih=w_ih, w_hh=w_hh, b_ih=b_ih, b_hh=b_hh,
                w_out=w_out, b_out=b_out, H=H, V=V, Hp=Hp, Vp=Vp, tile_v=tile_v)


# ----------------------------------------------------------------------------
# Forward wrapper (same semantics as DecoderRNN.forward)
# ----------------------------------------------------------------------------
def decoder_rnn_forward(token, hidden, prepped):
    """token: int (1,1); hidden: [1,1,H] f32 -> (log_probs [1,V], hidden [1,1,H])."""
    H, V = prepped["H"], prepped["V"]
    Hp, Vp, tv = prepped["Hp"], prepped["Vp"], prepped["tile_v"]
    nj = Vp // tv

    tok = jnp.reshape(token, ()).astype(jnp.int32)
    emb = prepped["embedding"][tok][None, :]                    # (1, Hp) bf16  (row gather)
    h0 = jnp.zeros((1, Hp), jnp.float32).at[:, :H].set(jnp.reshape(hidden, (1, H)))

    bytes_accessed = (
        emb.size * 2 + h0.size * 4
        + prepped["w_ih"].size * 2 + prepped["w_hh"].size * 2
        + prepped["b_ih"].size * 4 + prepped["b_hh"].size * 4
        + prepped["w_out"].size * 2 + prepped["b_out"].size * 4
        + Vp * 4 + Hp * 4)
    cost = pl.CostEstimate(
        flops=2 * (2 * Hp * 3 * Hp + Hp * Vp),
        transcendentals=3 * Hp + Vp,
        bytes_accessed=int(bytes_accessed))

    logp, h_new = pl.pallas_call(
        decoder_rnn_kernel,
        out_shape=(
            jax.ShapeDtypeStruct((1, Vp), jnp.float32),
            jax.ShapeDtypeStruct((1, Hp), jnp.float32),
        ),
        grid=(nj,),
        in_specs=[
            pl.BlockSpec((1, Hp), lambda j: (0, 0)),            # embedded row (bf16)
            pl.BlockSpec((1, Hp), lambda j: (0, 0)),            # hidden (f32)
            pl.BlockSpec((Hp, 3 * Hp), lambda j: (0, 0)),       # W_ih (resident, bf16)
            pl.BlockSpec((Hp, 3 * Hp), lambda j: (0, 0)),       # W_hh (resident, bf16)
            pl.BlockSpec((1, 3 * Hp), lambda j: (0, 0)),        # b_ih
            pl.BlockSpec((1, 3 * Hp), lambda j: (0, 0)),        # b_hh
            pl.BlockSpec((Hp, tv), lambda j: (0, j)),           # W_out tile (streamed)
            pl.BlockSpec((1, tv), lambda j: (0, j)),            # b_out tile
        ],
        out_specs=(
            pl.BlockSpec((1, Vp), lambda j: (0, 0)),            # log-probs (resident)
            pl.BlockSpec((1, Hp), lambda j: (0, 0)),            # new hidden (resident)
        ),
        scratch_shapes=[
            pltpu.VMEM((1, Hp), jnp.bfloat16),                  # h_new cast once for MXU
            pltpu.VMEM((nj, 1, tv), jnp.float32),               # raw logits per tile
            pltpu.VMEM((1, 1), jnp.float32),                    # running max
            pltpu.VMEM((1, 1), jnp.float32),                    # running sum-exp
        ],
        compiler_params=pltpu.CompilerParams(
            dimension_semantics=("arbitrary",),
            vmem_limit_bytes=32 * 1024 * 1024),
        cost_estimate=cost,
    )(emb, h0,
      prepped["w_ih"], prepped["w_hh"], prepped["b_ih"], prepped["b_hh"],
      prepped["w_out"], prepped["b_out"])

    return logp[:, :V], h_new[:, :H].reshape(1, 1, H)


# ----------------------------------------------------------------------------
# Pure-JAX reference (same padded/bf16 arithmetic) for a correctness check
# ----------------------------------------------------------------------------
def reference_forward(token, hidden, prepped):
    H, V, Hp = prepped["H"], prepped["V"], prepped["Hp"]
    tok = jnp.reshape(token, ()).astype(jnp.int32)
    x = jnp.maximum(prepped["embedding"][tok][None, :], 0)
    h = jnp.zeros((1, Hp), jnp.float32).at[:, :H].set(jnp.reshape(hidden, (1, H)))
    gi = jnp.dot(x, prepped["w_ih"], preferred_element_type=jnp.float32) + prepped["b_ih"]
    gh = jnp.dot(h.astype(jnp.bfloat16), prepped["w_hh"],
                 preferred_element_type=jnp.float32) + prepped["b_hh"]
    r = jax.nn.sigmoid(gi[:, :Hp] + gh[:, :Hp])
    z = jax.nn.sigmoid(gi[:, Hp:2 * Hp] + gh[:, Hp:2 * Hp])
    n = jnp.tanh(gi[:, 2 * Hp:] + r * gh[:, 2 * Hp:])
    h_new = (1.0 - z) * n + z * h
    logits = jnp.dot(h_new.astype(jnp.bfloat16), prepped["w_out"],
                     preferred_element_type=jnp.float32) + prepped["b_out"]
    logp = jax.nn.log_softmax(logits[:, :V], axis=1)
    return logp, h_new[:, :H].reshape(1, 1, H)


# ----------------------------------------------------------------------------
if __name__ == "__main__":
    hidden_size = 32      # padded to 128 lanes inside the kernel
    output_size = 300     # padded to a multiple of the V tile (128 here) -> 3 tiles

    key = jax.random.PRNGKey(0)
    pkey, tkey, hkey = jax.random.split(key, 3)

    raw_params = init_params(pkey, hidden_size, output_size)
    prepped = prepare_params(raw_params, tile_v=128)   # small tile to exercise the grid

    token = jax.random.randint(tkey, (1, 1), 0, output_size, dtype=jnp.int32)
    # random hidden (module accepts any hidden; zeros = initHidden() also works)
    hidden = 0.1 * jax.random.normal(hkey, (1, 1, hidden_size), jnp.float32)

    log_probs, new_hidden = decoder_rnn_forward(token, hidden, prepped)
    jax.block_until_ready((log_probs, new_hidden))

    assert log_probs.shape == (1, output_size)
    assert new_hidden.shape == (1, 1, hidden_size)
    # probabilities sum to 1
    assert abs(float(jnp.sum(jnp.exp(log_probs))) - 1.0) < 1e-3

    # compare against the pure-JAX reference (same bf16 weights, loose tolerance)
    ref_lp, ref_h = reference_forward(token, hidden, prepped)
    assert bool(jnp.allclose(log_probs, ref_lp, atol=3e-2, rtol=3e-2))
    assert bool(jnp.allclose(new_hidden, ref_h, atol=3e-2, rtol=3e-2))

    print("KERNEL_OK")
</pallas_src>

<mosaic_0001>
module attributes {stable_mosaic.version = 11 : i64} {
  func.func @decoder_rnn_kernel(%arg0: i32, %arg1: memref<1x128xbf16, #tpu.memory_space<vmem>>, %arg2: memref<1x128xf32, #tpu.memory_space<vmem>>, %arg3: memref<128x384xbf16, #tpu.memory_space<vmem>>, %arg4: memref<128x384xbf16, #tpu.memory_space<vmem>>, %arg5: memref<1x384xf32, #tpu.memory_space<vmem>>, %arg6: memref<1x384xf32, #tpu.memory_space<vmem>>, %arg7: memref<128x128xbf16, #tpu.memory_space<vmem>>, %arg8: memref<1x128xf32, #tpu.memory_space<vmem>>, %arg9: memref<1x384xf32, #tpu.memory_space<vmem>>, %arg10: memref<1x128xf32, #tpu.memory_space<vmem>>, %arg11: memref<1x128xbf16, #tpu.memory_space<vmem>>, %arg12: memref<3x1x128xf32, #tpu.memory_space<vmem>>, %arg13: memref<1x1xf32, #tpu.memory_space<vmem>>, %arg14: memref<1x1xf32, #tpu.memory_space<vmem>>) attributes {dimension_semantics = [#tpu.dimension_semantics<arbitrary>], iteration_bounds = array<i64: 3>, scalar_prefetch = 0 : i64, scratch_operands = 4 : i64, tpu.core_type = #tpu.core_type<tc>, window_params = [{pipeline_mode = #tpu.pipeline_mode<synchronous>, transform_indices = @transform_0, window_bounds = array<i64: 1, 128>}, {pipeline_mode = #tpu.pipeline_mode<synchronous>, transform_indices = @transform_1, window_bounds = array<i64: 1, 128>}, {pipeline_mode = #tpu.pipeline_mode<synchronous>, transform_indices = @transform_2, window_bounds = array<i64: 128, 384>}, {pipeline_mode = #tpu.pipeline_mode<synchronous>, transform_indices = @transform_3, window_bounds = array<i64: 128, 384>}, {pipeline_mode = #tpu.pipeline_mode<synchronous>, transform_indices = @transform_4, window_bounds = array<i64: 1, 384>}, {pipeline_mode = #tpu.pipeline_mode<synchronous>, transform_indices = @transform_5, window_bounds = array<i64: 1, 384>}, {transform_indices = @transform_6, window_bounds = array<i64: 128, 128>}, {transform_indices = @transform_7, window_bounds = array<i64: 1, 128>}, {pipeline_mode = #tpu.pipeline_mode<synchronous>, transform_indices = @transform_8, window_bounds = array<i64: 1, 384>}, {pipeline_mode = #tpu.pipeline_mode<synchronous>, transform_indices = @transform_9, window_bounds = array<i64: 1, 128>}]} {
    %c0_i32 = arith.constant 0 : i32
    %0 = arith.cmpi eq, %arg0, %c0_i32 : i32
    %1 = arith.extui %0 : i1 to i32
    %c0_i32_0 = arith.constant 0 : i32
    %2 = arith.cmpi ne, %1, %c0_i32_0 : i32
    scf.if %2 {
      %c0_19 = arith.constant 0 : index
      %c0_20 = arith.constant 0 : index
      %31 = vector.load %arg1[%c0_19, %c0_20] : memref<1x128xbf16, #tpu.memory_space<vmem>>, vector<1x128xbf16>
      %cst_21 = arith.constant 0.000000e+00 : bf16
      %32 = vector.broadcast %cst_21 : bf16 to vector<1x128xbf16>
      %33 = arith.maximumf %31, %32 : vector<1x128xbf16>
      %c0_22 = arith.constant 0 : index
      %c0_23 = arith.constant 0 : index
      %34 = vector.load %arg2[%c0_22, %c0_23] : memref<1x128xf32, #tpu.memory_space<vmem>>, vector<1x128xf32>
      %c0_24 = arith.constant 0 : index
      %c0_25 = arith.constant 0 : index
      %35 = vector.load %arg3[%c0_24, %c0_25] : memref<128x384xbf16, #tpu.memory_space<vmem>>, vector<128x384xbf16>
      %cst_26 = arith.constant dense<0.000000e+00> : vector<1x384xf32>
      %36 = tpu.matmul %33, %35, %cst_26 {dimension_numbers = #tpu.dot_dimension_numbers<[1], [0], [0], [1], [0, 0, 1, 1], [], []>} : vector<1x128xbf16>, vector<128x384xbf16>, vector<1x384xf32> -> vector<1x384xf32>
      %c0_27 = arith.constant 0 : index
      %c0_28 = arith.constant 0 : index
      %37 = vector.load %arg5[%c0_27, %c0_28] : memref<1x384xf32, #tpu.memory_space<vmem>>, vector<1x384xf32>
      %38 = arith.addf %36, %37 : vector<1x384xf32>
      %39 = arith.truncf %34 : vector<1x128xf32> to vector<1x128xbf16>
      %c0_29 = arith.constant 0 : index
      %c0_30 = arith.constant 0 : index
      %40 = vector.load %arg4[%c0_29, %c0_30] : memref<128x384xbf16, #tpu.memory_space<vmem>>, vector<128x384xbf16>
      %cst_31 = arith.constant dense<0.000000e+00> : vector<1x384xf32>
      %41 = tpu.matmul %39, %40, %cst_31 {dimension_numbers = #tpu.dot_dimension_numbers<[1], [0], [0], [1], [0, 0, 1, 1], [], []>} : vector<1x128xbf16>, vector<128x384xbf16>, vector<1x384xf32> -> vector<1x384xf32>
      %c0_32 = arith.constant 0 : index
      %c0_33 = arith.constant 0 : index
      %42 = vector.load %arg6[%c0_32, %c0_33] : memref<1x384xf32, #tpu.memory_space<vmem>>, vector<1x384xf32>
      %43 = arith.addf %41, %42 : vector<1x384xf32>
      %44 = vector.extract_strided_slice %38 {offsets = [0, 0], sizes = [1, 128], strides = [1, 1]} : vector<1x384xf32> to vector<1x128xf32>
      %45 = vector.extract_strided_slice %43 {offsets = [0, 0], sizes = [1, 128], strides = [1, 1]} : vector<1x384xf32> to vector<1x128xf32>
      %46 = arith.addf %44, %45 : vector<1x128xf32>
      %47 = arith.negf %46 : vector<1x128xf32>
      %48 = math.exp %47 : vector<1x128xf32>
      %cst_34 = arith.constant 1.000000e+00 : f32
      %49 = vector.broadcast %cst_34 : f32 to vector<1x128xf32>
      %50 = arith.addf %49, %48 : vector<1x128xf32>
      %51 = arith.divf %49, %50 : vector<1x128xf32>
      %52 = vector.extract_strided_slice %38 {offsets = [0, 128], sizes = [1, 128], strides = [1, 1]} : vector<1x384xf32> to vector<1x128xf32>
      %53 = vector.extract_strided_slice %43 {offsets = [0, 128], sizes = [1, 128], strides = [1, 1]} : vector<1x384xf32> to vector<1x128xf32>
      %54 = arith.addf %52, %53 : vector<1x128xf32>
      %55 = arith.negf %54 : vector<1x128xf32>
      %56 = math.exp %55 : vector<1x128xf32>
      %cst_35 = arith.constant 1.000000e+00 : f32
      %57 = vector.broadcast %cst_35 : f32 to vector<1x128xf32>
      %58 = arith.addf %57, %56 : vector<1x128xf32>
      %59 = arith.divf %57, %58 : vector<1x128xf32>
      %60 = vector.extract_strided_slice %38 {offsets = [0, 256], sizes = [1, 128], strides = [1, 1]} : vector<1x384xf32> to vector<1x128xf32>
      %61 = vector.extract_strided_slice %43 {offsets = [0, 256], sizes = [1, 128], strides = [1, 1]} : vector<1x384xf32> to vector<1x128xf32>
      %62 = arith.mulf %51, %61 : vector<1x128xf32>
      %63 = arith.addf %60, %62 : vector<1x128xf32>
      %64 = math.tanh %63 : vector<1x128xf32>
      %cst_36 = arith.constant 1.000000e+00 : f32
      %65 = vector.broadcast %cst_36 : f32 to vector<1x128xf32>
      %66 = arith.subf %65, %59 : vector<1x128xf32>
      %67 = arith.mulf %66, %64 : vector<1x128xf32>
      %68 = arith.mulf %59, %34 : vector<1x128xf32>
      %69 = arith.addf %67, %68 : vector<1x128xf32>
      %c0_37 = arith.constant 0 : index
      %c0_38 = arith.constant 0 : index
      %70 = vector.load %arg10[%c0_37, %c0_38] : memref<1x128xf32, #tpu.memory_space<vmem>>, vector<1x128xf32>
      tpu.vector_store %arg10[%c0_37, %c0_38], %69 {strides = array<i32>} : memref<1x128xf32, #tpu.memory_space<vmem>>, vector<1x128xf32>,
      %71 = arith.truncf %69 : vector<1x128xf32> to vector<1x128xbf16>
      %c0_39 = arith.constant 0 : index
      %c0_40 = arith.constant 0 : index
      %72 = vector.load %arg11[%c0_39, %c0_40] : memref<1x128xbf16, #tpu.memory_space<vmem>>, vector<1x128xbf16>
      tpu.vector_store %arg11[%c0_39, %c0_40], %71 {strides = array<i32>} : memref<1x128xbf16, #tpu.memory_space<vmem>>, vector<1x128xbf16>,
      %cst_41 = arith.constant 0xFF800000 : f32
      %73 = vector.broadcast %cst_41 : f32 to vector<1x1xf32>
      %c0_42 = arith.constant 0 : index
      %c0_43 = arith.constant 0 : index
      %74 = vector.load %arg13[%c0_42, %c0_43] : memref<1x1xf32, #tpu.memory_space<vmem>>, vector<1x1xf32>
      tpu.vector_store %arg13[%c0_42, %c0_43], %73 {strides = array<i32>} : memref<1x1xf32, #tpu.memory_space<vmem>>, vector<1x1xf32>,
      %cst_44 = arith.constant 0.000000e+00 : f32
      %75 = vector.broadcast %cst_44 : f32 to vector<1x1xf32>
      %c0_45 = arith.constant 0 : index
      %c0_46 = arith.constant 0 : index
      %76 = vector.load %arg14[%c0_45, %c0_46] : memref<1x1xf32, #tpu.memory_space<vmem>>, vector<1x1xf32>
      tpu.vector_store %arg14[%c0_45, %c0_46], %75 {strides = array<i32>} : memref<1x1xf32, #tpu.memory_space<vmem>>, vector<1x1xf32>,
    } else {
    }
    %c0 = arith.constant 0 : index
    %c0_1 = arith.constant 0 : index
    %3 = vector.load %arg11[%c0, %c0_1] : memref<1x128xbf16, #tpu.memory_space<vmem>>, vector<1x128xbf16>
    %c0_2 = arith.constant 0 : index
    %c0_3 = arith.constant 0 : index
    %4 = vector.load %arg7[%c0_2, %c0_3] : memref<128x128xbf16, #tpu.memory_space<vmem>>, vector<128x128xbf16>
    %cst = arith.constant dense<0.000000e+00> : vector<1x128xf32>
    %5 = tpu.matmul %3, %4, %cst {dimension_numbers = #tpu.dot_dimension_numbers<[1], [0], [0], [1], [0, 0, 1, 1], [], []>} : vector<1x128xbf16>, vector<128x128xbf16>, vector<1x128xf32> -> vector<1x128xf32>
    %c0_4 = arith.constant 0 : index
    %c0_5 = arith.constant 0 : index
    %6 = vector.load %arg8[%c0_4, %c0_5] : memref<1x128xf32, #tpu.memory_space<vmem>>, vector<1x128xf32>
    %7 = arith.addf %5, %6 : vector<1x128xf32>
    %8 = arith.index_cast %arg0 : i32 to index
    %c0_6 = arith.constant 0 : index
    %c0_7 = arith.constant 0 : index
    %9 = vector.load %arg12[%8, %c0_6, %c0_7] : memref<3x1x128xf32, #tpu.memory_space<vmem>>, vector<1x1x128xf32>
    %10 = vector.shape_cast %9 : vector<1x1x128xf32> to vector<1x128xf32>
    %11 = vector.shape_cast %7 : vector<1x128xf32> to vector<1x1x128xf32>
    tpu.vector_store %arg12[%8, %c0_6, %c0_7], %11 {strides = array<i32>} : memref<3x1x128xf32, #tpu.memory_space<vmem>>, vector<1x1x128xf32>,
    %c0_8 = arith.constant 0 : index
    %c0_9 = arith.constant 0 : index
    %12 = vector.load %arg13[%c0_8, %c0_9] : memref<1x1xf32, #tpu.memory_space<vmem>>, vector<1x1xf32>
    %cst_10 = arith.constant dense<0xFF800000> : vector<1xf32>
    %13 = vector.multi_reduction <maximumf>, %7, %cst_10 [1] : vector<1x128xf32> to vector<1xf32>
    %14 = vector.shape_cast %13 : vector<1xf32> to vector<1x1xf32>
    %15 = arith.maximumf %12, %14 : vector<1x1xf32>
    %c0_11 = arith.constant 0 : index
    %c0_12 = arith.constant 0 : index
    %16 = vector.load %arg14[%c0_11, %c0_12] : memref<1x1xf32, #tpu.memory_space<vmem>>, vector<1x1xf32>
    %17 = arith.subf %12, %15 : vector<1x1xf32>
    %18 = math.exp %17 : vector<1x1xf32>
    %19 = arith.mulf %16, %18 : vector<1x1xf32>
    %20 = vector.broadcast %15 : vector<1x1xf32> to vector<1x128xf32>
    %21 = arith.subf %7, %20 : vector<1x128xf32>
    %22 = math.exp %21 : vector<1x128xf32>
    %cst_13 = arith.constant dense<0.000000e+00> : vector<1xf32>
    %23 = vector.multi_reduction <add>, %22, %cst_13 [1] : vector<1x128xf32> to vector<1xf32>
    %24 = vector.shape_cast %23 : vector<1xf32> to vector<1x1xf32>
    %25 = arith.addf %19, %24 : vector<1x1xf32>
    %c0_14 = arith.constant 0 : index
    %c0_15 = arith.constant 0 : index
    %26 = vector.load %arg14[%c0_14, %c0_15] : memref<1x1xf32, #tpu.memory_space<vmem>>, vector<1x1xf32>
    tpu.vector_store %arg14[%c0_14, %c0_15], %25 {strides = array<i32>} : memref<1x1xf32, #tpu.memory_space<vmem>>, vector<1x1xf32>,
    %c0_16 = arith.constant 0 : index
    %c0_17 = arith.constant 0 : index
    %27 = vector.load %arg13[%c0_16, %c0_17] : memref<1x1xf32, #tpu.memory_space<vmem>>, vector<1x1xf32>
    tpu.vector_store %arg13[%c0_16, %c0_17], %15 {strides = array<i32>} : memref<1x1xf32, #tpu.memory_space<vmem>>, vector<1x1xf32>,
    %c2_i32 = arith.constant 2 : i32
    %28 = arith.cmpi eq, %arg0, %c2_i32 : i32
    %29 = arith.extui %28 : i1 to i32
    %c0_i32_18 = arith.constant 0 : i32
    %30 = arith.cmpi ne, %29, %c0_i32_18 : i32
    scf.if %30 {
      %c0_19 = arith.constant 0 : index
      %c0_20 = arith.constant 0 : index
      %31 = vector.load %arg13[%c0_19, %c0_20] : memref<1x1xf32, #tpu.memory_space<vmem>>, vector<1x1xf32>
      %c0_21 = arith.constant 0 : index
      %c0_22 = arith.constant 0 : index
      %32 = vector.load %arg14[%c0_21, %c0_22] : memref<1x1xf32, #tpu.memory_space<vmem>>, vector<1x1xf32>
      %33 = math.log %32 : vector<1x1xf32>
      %34 = arith.addf %31, %33 : vector<1x1xf32>
      %c0_23 = arith.constant 0 : index
      %c0_24 = arith.constant 0 : index
      %c0_25 = arith.constant 0 : index
      %35 = vector.load %arg12[%c0_23, %c0_24, %c0_25] : memref<3x1x128xf32, #tpu.memory_space<vmem>>, vector<1x1x128xf32>
      %36 = vector.shape_cast %35 : vector<1x1x128xf32> to vector<1x128xf32>
      %37 = vector.broadcast %34 : vector<1x1xf32> to vector<1x128xf32>
      %38 = arith.subf %36, %37 : vector<1x128xf32>
      %c0_26 = arith.constant 0 : index
      %c0_27 = arith.constant 0 : index
      %39 = vector.load %arg9[%c0_26, %c0_27] : memref<1x384xf32, #tpu.memory_space<vmem>>, vector<1x128xf32>
      tpu.vector_store %arg9[%c0_26, %c0_27], %38 {strides = array<i32>} : memref<1x384xf32, #tpu.memory_space<vmem>>, vector<1x128xf32>,
      %c1 = arith.constant 1 : index
      %c0_28 = arith.constant 0 : index
      %c0_29 = arith.constant 0 : index
      %40 = vector.load %arg12[%c1, %c0_28, %c0_29] : memref<3x1x128xf32, #tpu.memory_space<vmem>>, vector<1x1x128xf32>
      %41 = vector.shape_cast %40 : vector<1x1x128xf32> to vector<1x128xf32>
      %42 = vector.broadcast %34 : vector<1x1xf32> to vector<1x128xf32>
      %43 = arith.subf %41, %42 : vector<1x128xf32>
      %c0_30 = arith.constant 0 : index
      %c128 = arith.constant 128 : index
      %44 = vector.load %arg9[%c0_30, %c128] : memref<1x384xf32, #tpu.memory_space<vmem>>, vector<1x128xf32>
      tpu.vector_store %arg9[%c0_30, %c128], %43 {strides = array<i32>} : memref<1x384xf32, #tpu.memory_space<vmem>>, vector<1x128xf32>,
      %c2 = arith.constant 2 : index
      %c0_31 = arith.constant 0 : index
      %c0_32 = arith.constant 0 : index
      %45 = vector.load %arg12[%c2, %c0_31, %c0_32] : memref<3x1x128xf32, #tpu.memory_space<vmem>>, vector<1x1x128xf32>
      %46 = vector.shape_cast %45 : vector<1x1x128xf32> to vector<1x128xf32>
      %47 = vector.broadcast %34 : vector<1x1xf32> to vector<1x128xf32>
      %48 = arith.subf %46, %47 : vector<1x128xf32>
      %c0_33 = arith.constant 0 : index
      %c256 = arith.constant 256 : index
      %49 = vector.load %arg9[%c0_33, %c256] : memref<1x384xf32, #tpu.memory_space<vmem>>, vector<1x128xf32>
      tpu.vector_store %arg9[%c0_33, %c256], %48 {strides = array<i32>} : memref<1x384xf32, #tpu.memory_space<vmem>>, vector<1x128xf32>,
    } else {
    }
    return
  }
  func.func @transform_0(%arg0: i32) -> (i32, i32) {
    %c0_i32 = arith.constant 0 : i32
    %c0_i32_0 = arith.constant 0 : i32
    %c0_i32_1 = arith.constant 0 : i32
    return %c0_i32, %c0_i32_0 : i32, i32
  }
  func.func @transform_1(%arg0: i32) -> (i32, i32) {
    %c0_i32 = arith.constant 0 : i32
    %c0_i32_0 = arith.constant 0 : i32
    %c0_i32_1 = arith.constant 0 : i32
    return %c0_i32, %c0_i32_0 : i32, i32
  }
  func.func @transform_2(%arg0: i32) -> (i32, i32) {
    %c0_i32 = arith.constant 0 : i32
    %c0_i32_0 = arith.constant 0 : i32
    %c0_i32_1 = arith.constant 0 : i32
    return %c0_i32, %c0_i32_0 : i32, i32
  }
  func.func @transform_3(%arg0: i32) -> (i32, i32) {
    %c0_i32 = arith.constant 0 : i32
    %c0_i32_0 = arith.constant 0 : i32
    %c0_i32_1 = arith.constant 0 : i32
    return %c0_i32, %c0_i32_0 : i32, i32
  }
  func.func @transform_4(%arg0: i32) -> (i32, i32) {
    %c0_i32 = arith.constant 0 : i32
    %c0_i32_0 = arith.constant 0 : i32
    %c0_i32_1 = arith.constant 0 : i32
    return %c0_i32, %c0_i32_0 : i32, i32
  }
  func.func @transform_5(%arg0: i32) -> (i32, i32) {
    %c0_i32 = arith.constant 0 : i32
    %c0_i32_0 = arith.constant 0 : i32
    %c0_i32_1 = arith.constant 0 : i32
    return %c0_i32, %c0_i32_0 : i32, i32
  }
  func.func @transform_6(%arg0: i32) -> (i32, i32) {
    %c0_i32 = arith.constant 0 : i32
    %c0_i32_0 = arith.constant 0 : i32
    return %c0_i32, %arg0 : i32, i32
  }
  func.func @transform_7(%arg0: i32) -> (i32, i32) {
    %c0_i32 = arith.constant 0 : i32
    %c0_i32_0 = arith.constant 0 : i32
    return %c0_i32, %arg0 : i32, i32
  }
  func.func @transform_8(%arg0: i32) -> (i32, i32) {
    %c0_i32 = arith.constant 0 : i32
    %c0_i32_0 = arith.constant 0 : i32
    %c0_i32_1 = arith.constant 0 : i32
    return %c0_i32, %c0_i32_0 : i32, i32
  }
  func.func @transform_9(%arg0: i32) -> (i32, i32) {
    %c0_i32 = arith.constant 0 : i32
    %c0_i32_0 = arith.constant 0 : i32
    %c0_i32_1 = arith.constant 0 : i32
    return %c0_i32, %c0_i32_0 : i32, i32
  }
}

</mosaic_0001>

<llo_original>
// kernel: tpu_custom_call.1
$region0: #{tpu_custom_call.1}
  #allocation0 [shape = 'u32[]', space=smem, size = 0x4, offset = 0x4, fixed_abs, tag = 'smem constant byte address 0x4 - core index']
  #allocation1 [shape = 'u32[144,128]{1,0:T(1,128)}', space=vmem, size = 0x12000, scoped, tag = 'internal scratch']
  #allocation2 [shape = 'bf16[1,128]{1,0:T(2,128)(2,1)}', space=vmem, size = 0x200, scoped, tag = 'scratch operand']
  #allocation3 [shape = 'f32[3,1,128]{2,1,0:T(1,128)}', space=vmem, size = 0x600, scoped, tag = 'scratch operand']
  #allocation4 [shape = 'f32[1,1]{1,0:T(1,128)}', space=vmem, size = 0x200, scoped, tag = 'scratch operand']
  #allocation5 [shape = 'f32[1,1]{1,0:T(1,128)}', space=vmem, size = 0x200, scoped, tag = 'scratch operand']
  %s0 = inlined_call_operand.hbm [shape: bf16[1,128], index: 0, kind: input, shape index: {}]
  %s1 = inlined_call_operand.vmem [shape: f32[1,128], index: 1, kind: input, shape index: {}]
  %s2 = inlined_call_operand.hbm [shape: bf16[128,384], index: 2, kind: input, shape index: {}]
  %s3 = inlined_call_operand.hbm [shape: bf16[128,384], index: 3, kind: input, shape index: {}]
  %s4 = inlined_call_operand.vmem [shape: f32[1,384], index: 4, kind: input, shape index: {}]
  %s5 = inlined_call_operand.vmem [shape: f32[1,384], index: 5, kind: input, shape index: {}]
  %s6 = inlined_call_operand.hbm [shape: bf16[128,384], index: 6, kind: input, shape index: {}]
  %s7 = inlined_call_operand.vmem [shape: f32[1,384], index: 7, kind: input, shape index: {}]
  %s8 = inlined_call_operand.hbm [shape: f32[1,384], index: 8, kind: output, shape index: {0}]
  %s9 = inlined_call_operand.hbm [shape: f32[1,128], index: 9, kind: output, shape index: {1}]
  %10 = xla_tuple %s8, %s9
  %s11 = sld [smem:[#allocation0]]
  $region97: #{tpu_custom_call.1} parent=0
    _
  %s13 = ssub.s32 1, %s11
  %s14 = scalar_select 0, %s13, %s11
  $region1: #{tpu_custom_call.1} parent=0
    #allocation6 [shape = 'u8[512]{0}', space=vmem, size = 0x400, scoped, tag = 'input window, operand 0, single buffered']
    #allocation7 [shape = 's32[2]{0}', space=sflag, size = 0x8, scoped, tag = 'scoped memory for tpu_custom_call.1']
    #allocation8 [shape = 's32[2]{0}', space=sflag, size = 0x8, scoped, tag = 'scoped memory for tpu_custom_call.1']
    #allocation9 [shape = 'u8[98304]{0}', space=vmem, size = 0x18000, scoped, tag = 'input window, operand 2, single buffered']
    #allocation10 [shape = 's32[1]{0}', space=sflag, size = 0x4, scoped, tag = 'scoped memory for tpu_custom_call.1']
    #allocation11 [shape = 'u8[98304]{0}', space=vmem, size = 0x18000, scoped, tag = 'input window, operand 3, single buffered']
    #allocation12 [shape = 'u8[65536]{0}', space=vmem, size = 0x10000, scoped, tag = 'input window, operand 6']
    #allocation13 [shape = 's32[2]{0}', space=sflag, size = 0x8, scoped, tag = 'scoped memory for tpu_custom_call.1']
    #allocation14 [shape = 'u8[1536]{0}', space=vmem, size = 0x800, scoped, tag = 'output window, operand 0, single buffered']
    #allocation15 [shape = 'u8[512]{0}', space=vmem, size = 0x400, scoped, tag = 'output window, operand 1, single buffered']
    #allocation16 [shape = 's32[1]{0}', space=sflag, size = 0x4, scoped, tag = 'scoped memory for tpu_custom_call.1']
    %15 = vsyncpa [#allocation7], 0
    %16 = vsyncpa [#allocation10], 0
    %17 = vsyncpa [#allocation13], 0
    %s18 = scalar_lea.sflag [#allocation13], 1
    %19 = vsyncpa %s18, 0
    %20 = vsyncpa [#allocation8], 0
    %21 = vsyncpa [#allocation16], 0
    loop: start=0, step=1, limit=5
    $region2: #{tpu_custom_call.1} parent=1 // loop_pre_header
      _
    $region3: #{tpu_custom_call.1} parent=1 // loop_header
      %s23 = sphi 0, %s27
      %p24 = scmp.ge.s32.totalorder %s23, 5
      %s31 = sphi 0, %s31
      %s33 = sphi 0, %s31
      %s34 = sphi 0, %s33
      %s48 = sphi 0, %s34
      %s52 = sphi 0, %s52
      %s54 = sphi 0, %s52
      %s55 = sphi 0, %s54
      %s69 = sphi 0, %s55
      %s73 = sphi 0, %s73
      %s75 = sphi 0, %s73
      %s76 = sphi 0, %s75
      %s90 = sphi 0, %s76
      %s94 = sphi 0, %s94
      %s96 = sphi 0, %s94
      %s97 = sphi 0, %s96
      %s111 = sphi 0, %s97
      %s115 = sphi 0, %s115
      %s117 = sphi 0, %s115
      %s118 = sphi 0, %s117
      %s132 = sphi 0, %s118
      %s136 = sphi 0, %s136
      %s138 = sphi 0, %s136
      %s139 = sphi 0, %s138
      %s153 = sphi 0, %s139
      %s159 = sphi 0, %s161
      %s162 = sphi 0, %s159
      %s163 = sphi 0, %s162
      %s179 = sphi 0, %s163
      %s185 = sphi 0, %s187
      %s188 = sphi 0, %s185
      %s189 = sphi 0, %s188
      %s205 = sphi 0, %s189
      %s209 = sphi 0, %s209
      %s211 = sphi 0, %s209
      %s212 = sphi 0, %s211
      %s226 = sphi 0, %s212
      %s230 = sphi 0, %s230
      %s232 = sphi 0, %s230
      %s233 = sphi 0, %s232
      %s247 = sphi 0, %s233
    $region4: #{tpu_custom_call.1} parent=1 // loop_header_branch
      %26 = sbr.rel (%p24) target = $region8
    $region5: #{tpu_custom_call.1} parent=1 // loop_body
      %s28 = ssub.s32 %s23, 1
      %s29 = ssub.s32 %s23, 2
      %s30 = sadd.s32 %s23, 1
      %s32 = sadd.s32 %s31, 1
      %p35 = scmp.eq.s32.totalorder %s23, 2
      %p36 = scmp.ne.s32.totalorder %s31, %s33
      %p37 = scmp.eq.s32.totalorder %s23, 0
      %p38 = por %p36, %p37
      %p39 = scmp.ne.s32.totalorder %s31, %s33
      %p40 = scmp.eq.s32.totalorder %s28, 2
      %p41 = por %p39, %p40
      %p42 = scmp.ne.s32.totalorder %s33, %s34
      %p43 = scmp.eq.s32.totalorder %s28, 0
      %p44 = por %p42, %p43
      %p45 = scmp.ne.s32.totalorder %s33, %s34
      %p46 = scmp.eq.s32.totalorder %s29, 2
      %p47 = por %p45, %p46
      %p49 = scmp.ne.s32.totalorder %s34, %s48
      %p50 = scmp.eq.s32.totalorder %s29, 0
      %p51 = por %p49, %p50
      %s53 = sadd.s32 %s52, 1
      %p56 = scmp.eq.s32.totalorder %s23, 2
      %p57 = scmp.ne.s32.totalorder %s52, %s54
      %p58 = scmp.eq.s32.totalorder %s23, 0
      %p59 = por %p57, %p58
      %p60 = scmp.ne.s32.totalorder %s52, %s54
      %p61 = scmp.eq.s32.totalorder %s28, 2
      %p62 = por %p60, %p61
      %p63 = scmp.ne.s32.totalorder %s54, %s55
      %p64 = scmp.eq.s32.totalorder %s28, 0
      %p65 = por %p63, %p64
      %p66 = scmp.ne.s32.totalorder %s54, %s55
      %p67 = scmp.eq.s32.totalorder %s29, 2
      %p68 = por %p66, %p67
      %p70 = scmp.ne.s32.totalorder %s55, %s69
      %p71 = scmp.eq.s32.totalorder %s29, 0
      %p72 = por %p70, %p71
      %s74 = sadd.s32 %s73, 1
      %p77 = scmp.eq.s32.totalorder %s23, 2
      %p78 = scmp.ne.s32.totalorder %s73, %s75
      %p79 = scmp.eq.s32.totalorder %s23, 0
      %p80 = por %p78, %p79
      %p81 = scmp.ne.s32.totalorder %s73, %s75
      %p82 = scmp.eq.s32.totalorder %s28, 2
      %p83 = por %p81, %p82
      %p84 = scmp.ne.s32.totalorder %s75, %s76
      %p85 = scmp.eq.s32.totalorder %s28, 0
      %p86 = por %p84, %p85
      %p87 = scmp.ne.s32.totalorder %s75, %s76
      %p88 = scmp.eq.s32.totalorder %s29, 2
      %p89 = por %p87, %p88
      %p91 = scmp.ne.s32.totalorder %s76, %s90
      %p92 = scmp.eq.s32.totalorder %s29, 0
      %p93 = por %p91, %p92
      %s95 = sadd.s32 %s94, 1
      %p98 = scmp.eq.s32.totalorder %s23, 2
      %p99 = scmp.ne.s32.totalorder %s94, %s96
      %p100 = scmp.eq.s32.totalorder %s23, 0
      %p101 = por %p99, %p100
      %p102 = scmp.ne.s32.totalorder %s94, %s96
      %p103 = scmp.eq.s32.totalorder %s28, 2
      %p104 = por %p102, %p103
      %p105 = scmp.ne.s32.totalorder %s96, %s97
      %p106 = scmp.eq.s32.totalorder %s28, 0
      %p107 = por %p105, %p106
      %p108 = scmp.ne.s32.totalorder %s96, %s97
      %p109 = scmp.eq.s32.totalorder %s29, 2
      %p110 = por %p108, %p109
      %p112 = scmp.ne.s32.totalorder %s97, %s111
      %p113 = scmp.eq.s32.totalorder %s29, 0
      %p114 = por %p112, %p113
      %s116 = sadd.s32 %s115, 1
      %p119 = scmp.eq.s32.totalorder %s23, 2
      %p120 = scmp.ne.s32.totalorder %s115, %s117
      %p121 = scmp.eq.s32.totalorder %s23, 0
      %p122 = por %p120, %p121
      %p123 = scmp.ne.s32.totalorder %s115, %s117
      %p124 = scmp.eq.s32.totalorder %s28, 2
      %p125 = por %p123, %p124
      %p126 = scmp.ne.s32.totalorder %s117, %s118
      %p127 = scmp.eq.s32.totalorder %s28, 0
      %p128 = por %p126, %p127
      %p129 = scmp.ne.s32.totalorder %s117, %s118
      %p130 = scmp.eq.s32.totalorder %s29, 2
      %p131 = por %p129, %p130
      %p133 = scmp.ne.s32.totalorder %s118, %s132
      %p134 = scmp.eq.s32.totalorder %s29, 0
      %p135 = por %p133, %p134
      %s137 = sadd.s32 %s136, 1
      %p140 = scmp.eq.s32.totalorder %s23, 2
      %p141 = scmp.ne.s32.totalorder %s136, %s138
      %p142 = scmp.eq.s32.totalorder %s23, 0
      %p143 = por %p141, %p142
      %p144 = scmp.ne.s32.totalorder %s136, %s138
      %p145 = scmp.eq.s32.totalorder %s28, 2
      %p146 = por %p144, %p145
      %p147 = scmp.ne.s32.totalorder %s138, %s139
      %p148 = scmp.eq.s32.totalorder %s28, 0
      %p149 = por %p147, %p148
      %p150 = scmp.ne.s32.totalorder %s138, %s139
      %p151 = scmp.eq.s32.totalorder %s29, 2
      %p152 = por %p150, %p151
      %p154 = scmp.ne.s32.totalorder %s139, %s153
      %p155 = scmp.eq.s32.totalorder %s29, 0
      %p156 = por %p154, %p155
      %s157 = ssub.s32 %s23, %s30
      %p158 = scmp.eq.s32.totalorder %s157, 0
      %s160 = sadd.s32 %s159, 1
      %s161 = scalar_select %p158, %s159, %s160
      %p164 = pneg %p158
      %p165 = scmp.eq.s32.totalorder %s23, 2
      %p166 = por %p164, %p165
      %p167 = scmp.ne.s32.totalorder %s159, %s162
      %p168 = scmp.eq.s32.totalorder %s23, 0
      %p169 = por %p167, %p168
      %p170 = scmp.ne.s32.totalorder %s159, %s162
      %p171 = scmp.eq.s32.totalorder %s28, 2
      %p172 = por %p170, %p171
      %p173 = scmp.ne.s32.totalorder %s162, %s163
      %p174 = scmp.eq.s32.totalorder %s28, 0
      %p175 = por %p173, %p174
      %p176 = scmp.ne.s32.totalorder %s162, %s163
      %p177 = scmp.eq.s32.totalorder %s29, 2
      %p178 = por %p176, %p177
      %p180 = scmp.ne.s32.totalorder %s163, %s179
      %p181 = scmp.eq.s32.totalorder %s29, 0
      %p182 = por %p180, %p181
      %s183 = ssub.s32 %s23, %s30
      %p184 = scmp.eq.s32.totalorder %s183, 0
      %s186 = sadd.s32 %s185, 1
      %s187 = scalar_select %p184, %s185, %s186
      %p190 = pneg %p184
      %p191 = scmp.eq.s32.totalorder %s23, 2
      %p192 = por %p190, %p191
      %p193 = scmp.ne.s32.totalorder %s185, %s188
      %p194 = scmp.eq.s32.totalorder %s23, 0
      %p195 = por %p193, %p194
      %p196 = scmp.ne.s32.totalorder %s185, %s188
      %p197 = scmp.eq.s32.totalorder %s28, 2
      %p198 = por %p196, %p197
      %p199 = scmp.ne.s32.totalorder %s188, %s189
      %p200 = scmp.eq.s32.totalorder %s28, 0
      %p201 = por %p199, %p200
      %p202 = scmp.ne.s32.totalorder %s188, %s189
      %p203 = scmp.eq.s32.totalorder %s29, 2
      %p204 = por %p202, %p203
      %p206 = scmp.ne.s32.totalorder %s189, %s205
      %p207 = scmp.eq.s32.totalorder %s29, 0
      %p208 = por %p206, %p207
      %s210 = sadd.s32 %s209, 1
      %p213 = scmp.eq.s32.totalorder %s23, 2
      %p214 = scmp.ne.s32.totalorder %s209, %s211
      %p215 = scmp.eq.s32.totalorder %s23, 0
      %p216 = por %p214, %p215
      %p217 = scmp.ne.s32.totalorder %s209, %s211
      %p218 = scmp.eq.s32.totalorder %s28, 2
      %p219 = por %p217, %p218
      %p220 = scmp.ne.s32.totalorder %s211, %s212
      %p221 = scmp.eq.s32.totalorder %s28, 0
      %p222 = por %p220, %p221
      %p223 = scmp.ne.s32.totalorder %s211, %s212
      %p224 = scmp.eq.s32.totalorder %s29, 2
      %p225 = por %p223, %p224
      %p227 = scmp.ne.s32.totalorder %s212, %s226
      %p228 = scmp.eq.s32.totalorder %s29, 0
      %p229 = por %p227, %p228
      %s231 = sadd.s32 %s230, 1
      %p234 = scmp.eq.s32.totalorder %s23, 2
      %p235 = scmp.ne.s32.totalorder %s230, %s232
      %p236 = scmp.eq.s32.totalorder %s23, 0
      %p237 = por %p235, %p236
      %p238 = scmp.ne.s32.totalorder %s230, %s232
      %p239 = scmp.eq.s32.totalorder %s28, 2
      %p240 = por %p238, %p239
      %p241 = scmp.ne.s32.totalorder %s232, %s233
      %p242 = scmp.eq.s32.totalorder %s28, 0
      %p243 = por %p241, %p242
      %p244 = scmp.ne.s32.totalorder %s232, %s233
      %p245 = scmp.eq.s32.totalorder %s29, 2
      %p246 = por %p244, %p245
      %p248 = scmp.ne.s32.totalorder %s233, %s247
      %p249 = scmp.eq.s32.totalorder %s29, 0
      %p250 = por %p248, %p249
      %p251 = scmp.le.s32.totalorder 1, %s23
      %p252 = scmp.lt.s32.totalorder %s23, 4
      %p253 = pnand %p251, %p252
      %p254 = pneg %p253
      // Predicated region
      $region9: #{tpu_custom_call.1} parent=5 // pred_check
        _
      $region10: #{tpu_custom_call.1} parent=5 // pred_check_branch
        %256 = sbr.rel (%p253) target = $region12
      $region11: #{tpu_custom_call.1} parent=5 // pred_region
        %s257 = ssub.s32 %s23, 1
        // Predicated region
        $region13: #{tpu_custom_call.1} parent=11 // pred_check
          %p258 = pneg %p44
        $region14: #{tpu_custom_call.1} parent=11 // pred_check_branch
          %260 = sbr.rel (%p258) target = $region16
        $region15: #{tpu_custom_call.1} parent=11 // pred_region
          %s262 = ssub.s32 16, 16
          %263 = vsyncadd [#allocation7], %s262
          %s265 = sshll.u32 [#allocation6], 4
          %s266 = int_to_ptr.vmem [resolvable:$true] %s265
          %268 = dma.hbm_to_vmem [thread:$0]  %s0, 16, %s266, [#allocation7]
        $region16: #{tpu_custom_call.1} parent=11 // pred_fallthru
          _
        // Predicated region
        $region17: #{tpu_custom_call.1} parent=11 // pred_check
          %p269 = pneg %p65
        $region18: #{tpu_custom_call.1} parent=11 // pred_check_branch
          %271 = sbr.rel (%p269) target = $region20
        $region19: #{tpu_custom_call.1} parent=11 // pred_region
          _
        $region20: #{tpu_custom_call.1} parent=11 // pred_fallthru
          _
        // Predicated region
        $region21: #{tpu_custom_call.1} parent=11 // pred_check
          %p272 = pneg %p86
        $region22: #{tpu_custom_call.1} parent=11 // pred_check_branch
          %274 = sbr.rel (%p272) target = $region24
        $region23: #{tpu_custom_call.1} parent=11 // pred_region
          %s276 = ssub.s32 3072, 3072
          %277 = vsyncadd [#allocation10], %s276
          %s278 = sshll.u32 [#allocation9], 4
          %s279 = int_to_ptr.vmem [resolvable:$true] %s278
          %284 = dma.hbm_to_vmem [thread:$0]  %s2, 3072, %s279, [#allocation10], 192, 192, 12
        $region24: #{tpu_custom_call.1} parent=11 // pred_fallthru
          _
        // Predicated region
        $region25: #{tpu_custom_call.1} parent=11 // pred_check
          %p285 = pneg %p107
        $region26: #{tpu_custom_call.1} parent=11 // pred_check_branch
          %287 = sbr.rel (%p285) target = $region28
        $region27: #{tpu_custom_call.1} parent=11 // pred_region
          %s289 = ssub.s32 3072, 3072
          %290 = vsyncadd [#allocation10], %s289
          %s291 = sshll.u32 [#allocation11], 4
          %s292 = int_to_ptr.vmem [resolvable:$true] %s291
          %297 = dma.hbm_to_vmem [thread:$0]  %s3, 3072, %s292, [#allocation10], 192, 192, 12
        $region28: #{tpu_custom_call.1} parent=11 // pred_fallthru
          _
        // Predicated region
        $region29: #{tpu_custom_call.1} parent=11 // pred_check
          %p298 = pneg %p128
        $region30: #{tpu_custom_call.1} parent=11 // pred_check_branch
          %300 = sbr.rel (%p298) target = $region32
        $region31: #{tpu_custom_call.1} parent=11 // pred_region
          _
        $region32: #{tpu_custom_call.1} parent=11 // pred_fallthru
          _
        // Predicated region
        $region33: #{tpu_custom_call.1} parent=11 // pred_check
          %p301 = pneg %p149
        $region34: #{tpu_custom_call.1} parent=11 // pred_check_branch
          %303 = sbr.rel (%p301) target = $region36
        $region35: #{tpu_custom_call.1} parent=11 // pred_region
          _
        $region36: #{tpu_custom_call.1} parent=11 // pred_fallthru
          _
      $region12: #{tpu_custom_call.1} parent=5 // pred_fallthru
        _
      %p304 = scmp.lt.s32.totalorder %s23, 3
      // Predicated region
      $region37: #{tpu_custom_call.1} parent=5 // pred_check
        %p305 = pneg %p304
      $region38: #{tpu_custom_call.1} parent=5 // pred_check_branch
        %307 = sbr.rel (%p305) target = $region40
      $region39: #{tpu_custom_call.1} parent=5 // pred_region
        // Predicated region
        $region41: #{tpu_custom_call.1} parent=39 // pred_check
          %p308 = pneg %p169
        $region42: #{tpu_custom_call.1} parent=39 // pred_check_branch
          %310 = sbr.rel (%p308) target = $region44
        $region43: #{tpu_custom_call.1} parent=39 // pred_region
          %s311 = sand.u32 %s159, 1
          %s312 = scalar_lea.sflag [#allocation13], %s311
          %s313 = sand.u32 %s159, 1
          %s314 = smul.addr %s313, 64
          %s315 = scalar_lea.vmem [#allocation12], %s314
          %s317 = ssub.s32 1024, 1024
          %318 = vsyncadd %s312, %s317
          %s319 = smul.addr %s23, 64
          %s320 = scalar_lea.hbm %s6, %s319
          %s321 = sshll.u32 %s315, 4
          %s322 = int_to_ptr.vmem [resolvable:$true] %s321
          %327 = dma.hbm_to_vmem [thread:$0]  %s320, 1024, %s322, %s312, 192, 64, 4
        $region44: #{tpu_custom_call.1} parent=39 // pred_fallthru
          _
        // Predicated region
        $region45: #{tpu_custom_call.1} parent=39 // pred_check
          %p328 = pneg %p195
        $region46: #{tpu_custom_call.1} parent=39 // pred_check_branch
          %330 = sbr.rel (%p328) target = $region48
        $region47: #{tpu_custom_call.1} parent=39 // pred_region
          %p331 = scmp.lt.s32.totalorder %s23, 2
          %s332 = scalar_select %p331, %s23, 2
          %s333 = scalar_lea.vmem %s7, %s332
        $region48: #{tpu_custom_call.1} parent=39 // pred_fallthru
          _
      $region40: #{tpu_custom_call.1} parent=5 // pred_fallthru
        _
      %p334 = scmp.le.s32.totalorder 1, %s23
      %p335 = scmp.lt.s32.totalorder %s23, 4
      %p336 = pnand %p334, %p335
      %p337 = pneg %p336
      // Predicated region
      $region49: #{tpu_custom_call.1} parent=5 // pred_check
        _
      $region50: #{tpu_custom_call.1} parent=5 // pred_check_branch
        %339 = sbr.rel (%p336) target = $region52
      $region51: #{tpu_custom_call.1} parent=5 // pred_region
        %s340 = ssub.s32 %s23, 1
        // Predicated region
        $region53: #{tpu_custom_call.1} parent=51 // pred_check
          %p341 = pneg %p44
        $region54: #{tpu_custom_call.1} parent=51 // pred_check_branch
          %343 = sbr.rel (%p341) target = $region56
        $region55: #{tpu_custom_call.1} parent=51 // pred_region
          %344 = dma.done [#allocation7], 16
        $region56: #{tpu_custom_call.1} parent=51 // pred_fallthru
          _
        // Predicated region
        $region57: #{tpu_custom_call.1} parent=51 // pred_check
          %p345 = pneg %p86
        $region58: #{tpu_custom_call.1} parent=51 // pred_check_branch
          %347 = sbr.rel (%p345) target = $region60
        $region59: #{tpu_custom_call.1} parent=51 // pred_region
          %348 = dma.done [#allocation10], 3072
        $region60: #{tpu_custom_call.1} parent=51 // pred_fallthru
          _
        // Predicated region
        $region61: #{tpu_custom_call.1} parent=51 // pred_check
          %p349 = pneg %p107
        $region62: #{tpu_custom_call.1} parent=51 // pred_check_branch
          %351 = sbr.rel (%p349) target = $region64
        $region63: #{tpu_custom_call.1} parent=51 // pred_region
          %352 = dma.done [#allocation10], 3072
        $region64: #{tpu_custom_call.1} parent=51 // pred_fallthru
          _
        %s353 = sand.u32 %s162, 1
        %s354 = scalar_lea.sflag [#allocation13], %s353
        %s355 = sand.u32 %s162, 1
        %s356 = smul.addr %s355, 64
        %s357 = scalar_lea.vmem [#allocation12], %s356
        // Predicated region
        $region65: #{tpu_custom_call.1} parent=51 // pred_check
          %p358 = pneg %p175
        $region66: #{tpu_custom_call.1} parent=51 // pred_check_branch
          %360 = sbr.rel (%p358) target = $region68
        $region67: #{tpu_custom_call.1} parent=51 // pred_region
          %361 = dma.done %s354, 1024
        $region68: #{tpu_custom_call.1} parent=51 // pred_fallthru
          _
        %p362 = pneg %p44
        %p363 = pneg %p41
        %p364 = pneg %p65
        %p365 = pneg %p62
        %p366 = pneg %p86
        %p367 = pneg %p83
        %p368 = pneg %p107
        %p369 = pneg %p104
        %p370 = pneg %p128
        %p371 = pneg %p125
        %p372 = pneg %p149
        %p373 = pneg %p146
        %s374 = sand.u32 %s162, 1
        %s375 = scalar_lea.sflag [#allocation13], %s374
        %s376 = sand.u32 %s162, 1
        %s377 = smul.addr %s376, 64
        %s378 = scalar_lea.vmem [#allocation12], %s377
        %p379 = pneg %p175
        %p380 = pneg %p172
        %p381 = scmp.lt.s32.totalorder %s28, 2
        %s382 = scalar_select %p381, %s28, 2
        %s383 = scalar_lea.vmem %s7, %s382
        %p384 = pneg %p201
        %p385 = pneg %p198
        %p386 = pneg %p222
        %p387 = pneg %p219
        %p388 = pneg %p243
        %p389 = pneg %p240
        %p390 = scmp.lt.s32.totalorder %s28, 2
        %s391 = scalar_select %p390, %s28, 2
        %s392 = scalar_lea.vmem %s7, %s391
        %p394 = scmp.eq.s32.totalorder %s28, 0
        // Predicated region
        $region69: #{tpu_custom_call.1} parent=51 // pred_check
          %p395 = pneg %p394
        $region70: #{tpu_custom_call.1} parent=51 // pred_check_branch
          %397 = sbr.rel (%p395) target = $region72
        $region71: #{tpu_custom_call.1} parent=51 // pred_region
          %v398 = vld [vmem:[#allocation6] sm:$0x1]
          %v399 = vmax.bf16 %v398, 0
          %v400 = vld [vmem:[%s1] sm:$0x1]
          %v401 = vld [vmem:[#allocation9] sm:$0xff]
          %v402 = vld [vmem:[#allocation9 + $0x8] sm:$0xf]
          %v403 = vld [vmem:[#allocation9 + $0xc] sm:$0xff]
          %v404 = vld [vmem:[#allocation9 + $0x14] sm:$0xf]
          %v405 = vld [vmem:[#allocation9 + $0x18] sm:$0xff]
          %v406 = vld [vmem:[#allocation9 + $0x20] sm:$0xf]
          %v407 = vld [vmem:[#allocation9 + $0x24] sm:$0xff]
          %v408 = vld [vmem:[#allocation9 + $0x2c] sm:$0xf]
          %v409 = vld [vmem:[#allocation9 + $0x30] sm:$0xff]
          %v410 = vld [vmem:[#allocation9 + $0x38] sm:$0xf]
          %v411 = vld [vmem:[#allocation9 + $0x3c] sm:$0xff]
          %v412 = vld [vmem:[#allocation9 + $0x44] sm:$0xf]
          %v413 = vld [vmem:[#allocation9 + $0x48] sm:$0xff]
          %v414 = vld [vmem:[#allocation9 + $0x50] sm:$0xf]
          %v415 = vld [vmem:[#allocation9 + $0x54] sm:$0xff]
          %v416 = vld [vmem:[#allocation9 + $0x5c] sm:$0xf]
          %v417 = vld [vmem:[#allocation9 + $0x60] sm:$0xff]
          %v418 = vld [vmem:[#allocation9 + $0x68] sm:$0xf]
          %v419 = vld [vmem:[#allocation9 + $0x6c] sm:$0xff]
          %v420 = vld [vmem:[#allocation9 + $0x74] sm:$0xf]
          %v421 = vld [vmem:[#allocation9 + $0x78] sm:$0xff]
          %v422 = vld [vmem:[#allocation9 + $0x80] sm:$0xf]
          %v423 = vld [vmem:[#allocation9 + $0x84] sm:$0xff]
          %v424 = vld [vmem:[#allocation9 + $0x8c] sm:$0xf]
          %v425 = vld [vmem:[#allocation9 + $0x90] sm:$0xff]
          %v426 = vld [vmem:[#allocation9 + $0x98] sm:$0xf]
          %v427 = vld [vmem:[#allocation9 + $0x9c] sm:$0xff]
          %v428 = vld [vmem:[#allocation9 + $0xa4] sm:$0xf]
          %v429 = vld [vmem:[#allocation9 + $0xa8] sm:$0xff]
          %v430 = vld [vmem:[#allocation9 + $0xb0] sm:$0xf]
          %v431 = vld [vmem:[#allocation9 + $0xb4] sm:$0xff]
          %v432 = vld [vmem:[#allocation9 + $0xbc] sm:$0xf]
          %v433 = vld [vmem:[%s4] sm:$0x7]
          %v466 = vunpack.c.l.b16 %v401
          %v467 = vunpack.c.h.b16 %v401
          %v468 = vunpack.c.l.b16 %v402
          %v469 = vunpack.c.l.b16 %v403
          %v470 = vunpack.c.h.b16 %v403
          %v471 = vunpack.c.l.b16 %v404
          %v472 = vunpack.c.l.b16 %v405
          %v473 = vunpack.c.h.b16 %v405
          %v474 = vunpack.c.l.b16 %v406
          %v475 = vunpack.c.l.b16 %v407
          %v476 = vunpack.c.h.b16 %v407
          %v477 = vunpack.c.l.b16 %v408
          %v478 = vunpack.c.l.b16 %v409
          %v479 = vunpack.c.h.b16 %v409
          %v480 = vunpack.c.l.b16 %v410
          %v481 = vunpack.c.l.b16 %v411
          %v482 = vunpack.c.h.b16 %v411
          %v483 = vunpack.c.l.b16 %v412
          %v484 = vunpack.c.l.b16 %v413
          %v485 = vunpack.c.h.b16 %v413
          %v486 = vunpack.c.l.b16 %v414
          %v487 = vunpack.c.l.b16 %v415
          %v488 = vunpack.c.h.b16 %v415
          %v489 = vunpack.c.l.b16 %v416
          %v490 = vunpack.c.l.b16 %v417
          %v491 = vunpack.c.h.b16 %v417
          %v492 = vunpack.c.l.b16 %v418
          %v493 = vunpack.c.l.b16 %v419
          %v494 = vunpack.c.h.b16 %v419
          %v495 = vunpack.c.l.b16 %v420
          %v496 = vunpack.c.l.b16 %v421
          %v497 = vunpack.c.h.b16 %v421
          %v498 = vunpack.c.l.b16 %v422
          %v499 = vunpack.c.l.b16 %v423
          %v500 = vunpack.c.h.b16 %v423
          %v501 = vunpack.c.l.b16 %v424
          %v502 = vunpack.c.l.b16 %v425
          %v503 = vunpack.c.h.b16 %v425
          %v504 = vunpack.c.l.b16 %v426
          %v505 = vunpack.c.l.b16 %v427
          %v506 = vunpack.c.h.b16 %v427
          %v507 = vunpack.c.l.b16 %v428
          %v508 = vunpack.c.l.b16 %v429
          %v509 = vunpack.c.h.b16 %v429
          %v510 = vunpack.c.l.b16 %v430
          %v511 = vunpack.c.l.b16 %v431
          %v512 = vunpack.c.h.b16 %v431
          %v513 = vunpack.c.l.b16 %v432
          %v514 = vpack.c.b16 %v469, %v466
          %v515 = vpack.c.b16 %v470, %v467
          %v516 = vpack.c.b16 %v471, %v468
          %v517 = vpack.c.b16 %v475, %v472
          %v518 = vpack.c.b16 %v476, %v473
          %v519 = vpack.c.b16 %v477, %v474
          %v520 = vpack.c.b16 %v481, %v478
          %v521 = vpack.c.b16 %v482, %v479
          %v522 = vpack.c.b16 %v483, %v480
          %v523 = vpack.c.b16 %v487, %v484
          %v524 = vpack.c.b16 %v488, %v485
          %v525 = vpack.c.b16 %v489, %v486
          %v526 = vpack.c.b16 %v493, %v490
          %v527 = vpack.c.b16 %v494, %v491
          %v528 = vpack.c.b16 %v495, %v492
          %v529 = vpack.c.b16 %v499, %v496
          %v530 = vpack.c.b16 %v500, %v497
          %v531 = vpack.c.b16 %v501, %v498
          %v532 = vpack.c.b16 %v505, %v502
          %v533 = vpack.c.b16 %v506, %v503
          %v534 = vpack.c.b16 %v507, %v504
          %v535 = vpack.c.b16 %v511, %v508
          %v536 = vpack.c.b16 %v512, %v509
          %v537 = vpack.c.b16 %v513, %v510
          %v563 = vlaneseq
          %v564 = vshrl.u32 %v563, 7
          %v565 = vsub.s32 0, %v564
          %v566 = vrot.slane %v433, %v565
          %v567 = vlaneseq
          %v568 = vshrl.u32 %v567, 7
          %v569 = vsub.s32 1, %v568
          %v570 = vrot.slane %v433, %v569
          %v571 = vlaneseq
          %v572 = vshrl.u32 %v571, 7
          %v573 = vsub.s32 2, %v572
          %v574 = vrot.slane %v433, %v573
          %578 = vmatprep.subr.bf16.mxu0 %v515
          %579 = vmatpush1.bf16.msra.mxu0 %v514
          %580 = vmatprep.subr.bf16.mxu0 %v518
          %581 = vmatpush1.bf16.msra.mxu0 %v517
          %582 = vmatprep.subr.bf16.mxu0 %v521
          %583 = vmatpush1.bf16.msra.mxu0 %v520
          %584 = vmatprep.subr.bf16.mxu0 %v524
          %585 = vmatpush1.bf16.msra.mxu0 %v523
          %586 = vmatprep.subr.bf16.mxu0 %v527
          %587 = vmatpush1.bf16.msra.mxu0 %v526
          %588 = vmatprep.subr.bf16.mxu0 %v530
          %589 = vmatpush1.bf16.msra.mxu0 %v529
          %590 = vmatprep.subr.bf16.mxu0 %v533
          %591 = vmatpush1.bf16.msra.mxu0 %v532
          %592 = vmatprep.subr.bf16.mxu0 %v536
          %593 = vmatpush1.bf16.msra.mxu0 %v535
          %594 = vmatprep.subr.bf16.mxu0 0
          %595 = vmatpush1.bf16.msra.mxu0 0
          %596 = vmatprep.subr.bf16.mxu0 0
          %597 = vmatpush1.bf16.msra.mxu0 0
          %598 = vmatprep.subr.bf16.mxu0 0
          %599 = vmatpush1.bf16.msra.mxu0 0
          %600 = vmatprep.subr.bf16.mxu0 0
          %601 = vmatpush1.bf16.msra.mxu0 0
          %602 = vmatprep.subr.bf16.mxu0 0
          %603 = vmatpush1.bf16.msra.mxu0 0
          %604 = vmatprep.subr.bf16.mxu0 0
          %605 = vmatpush1.bf16.msra.mxu0 0
          %606 = vmatprep.subr.bf16.mxu0 0
          %607 = vmatpush1.bf16.msra.mxu0 0
          %608 = vmatprep.subr.bf16.mxu0 0
          %609 = vmatpush1.bf16.msra.mxu0 0
          %610 = vmatprep.mubr.bf16.mxu0 0
          %611 = vmatmul.mubr.bf16.gmra.mrb[0].mxu0 %v399
          %v612 = vpop.f32.mrb[0].mxu0
          %v613 = vadd.f32 %v566, %v612
          %v614 = vpop.f32.mrb[0].mxu0
          %v615 = vadd.f32 %v570, %v614
          %v616 = vpop.f32.mrb[0].mxu0
          %v617 = vpop.f32.mrb[0].mxu0
          %618 = vdwg.mxu0
          %619 = vmatprep.subr.bf16.mxu0 0
          %620 = vmatpush1.bf16.msra.mxu0 %v516
          %621 = vmatprep.subr.bf16.mxu0 0
          %622 = vmatpush1.bf16.msra.mxu0 %v519
          %623 = vmatprep.subr.bf16.mxu0 0
          %624 = vmatpush1.bf16.msra.mxu0 %v522
          %625 = vmatprep.subr.bf16.mxu0 0
          %626 = vmatpush1.bf16.msra.mxu0 %v525
          %627 = vmatprep.subr.bf16.mxu0 0
          %628 = vmatpush1.bf16.msra.mxu0 %v528
          %629 = vmatprep.subr.bf16.mxu0 0
          %630 = vmatpush1.bf16.msra.mxu0 %v531
          %631 = vmatprep.subr.bf16.mxu0 0
          %632 = vmatpush1.bf16.msra.mxu0 %v534
          %633 = vmatprep.subr.bf16.mxu0 0
          %634 = vmatpush1.bf16.msra.mxu0 %v537
          %635 = vmatprep.subr.bf16.mxu0 0
          %636 = vmatpush1.bf16.msra.mxu0 0
          %637 = vmatprep.subr.bf16.mxu0 0
          %638 = vmatpush1.bf16.msra.mxu0 0
          %639 = vmatprep.subr.bf16.mxu0 0
          %640 = vmatpush1.bf16.msra.mxu0 0
          %641 = vmatprep.subr.bf16.mxu0 0
          %642 = vmatpush1.bf16.msra.mxu0 0
          %643 = vmatprep.subr.bf16.mxu0 0
          %644 = vmatpush1.bf16.msra.mxu0 0
          %645 = vmatprep.subr.bf16.mxu0 0
          %646 = vmatpush1.bf16.msra.mxu0 0
          %647 = vmatprep.subr.bf16.mxu0 0
          %648 = vmatpush1.bf16.msra.mxu0 0
          %649 = vmatprep.subr.bf16.mxu0 0
          %650 = vmatpush1.bf16.msra.mxu0 0
          %651 = vmatprep.mubr.bf16.mxu0 0
          %652 = vmatmul.mubr.bf16.gmra.mrb[0].mxu0 %v399
          %v653 = vpop.f32.mrb[0].mxu0
          %v654 = vadd.f32 %v574, %v653
          %v655 = vpop.f32.mrb[0].mxu0
          %v656 = vpop.f32.mrb[0].mxu0
          %v657 = vpop.f32.mrb[0].mxu0
          %658 = vdwg.mxu0
          %v659 = vpack.c.bf16 %v400, %v400
          %v660 = vld [vmem:[#allocation11] sm:$0xff]
          %v661 = vld [vmem:[#allocation11 + $0x8] sm:$0xf]
          %v662 = vld [vmem:[#allocation11 + $0xc] sm:$0xff]
          %v663 = vld [vmem:[#allocation11 + $0x14] sm:$0xf]
          %v664 = vld [vmem:[#allocation11 + $0x18] sm:$0xff]
          %v665 = vld [vmem:[#allocation11 + $0x20] sm:$0xf]
          %v666 = vld [vmem:[#allocation11 + $0x24] sm:$0xff]
          %v667 = vld [vmem:[#allocation11 + $0x2c] sm:$0xf]
          %v668 = vld [vmem:[#allocation11 + $0x30] sm:$0xff]
          %v669 = vld [vmem:[#allocation11 + $0x38] sm:$0xf]
          %v670 = vld [vmem:[#allocation11 + $0x3c] sm:$0xff]
          %v671 = vld [vmem:[#allocation11 + $0x44] sm:$0xf]
          %v672 = vld [vmem:[#allocation11 + $0x48] sm:$0xff]
          %v673 = vld [vmem:[#allocation11 + $0x50] sm:$0xf]
          %v674 = vld [vmem:[#allocation11 + $0x54] sm:$0xff]
          %v675 = vld [vmem:[#allocation11 + $0x5c] sm:$0xf]
          %v676 = vld [vmem:[#allocation11 + $0x60] sm:$0xff]
          %v677 = vld [vmem:[#allocation11 + $0x68] sm:$0xf]
          %v678 = vld [vmem:[#allocation11 + $0x6c] sm:$0xff]
          %v679 = vld [vmem:[#allocation11 + $0x74] sm:$0xf]
          %v680 = vld [vmem:[#allocation11 + $0x78] sm:$0xff]
          %v681 = vld [vmem:[#allocation11 + $0x80] sm:$0xf]
          %v682 = vld [vmem:[#allocation11 + $0x84] sm:$0xff]
          %v683 = vld [vmem:[#allocation11 + $0x8c] sm:$0xf]
          %v684 = vld [vmem:[#allocation11 + $0x90] sm:$0xff]
          %v685 = vld [vmem:[#allocation11 + $0x98] sm:$0xf]
          %v686 = vld [vmem:[#allocation11 + $0x9c] sm:$0xff]
          %v687 = vld [vmem:[#allocation11 + $0xa4] sm:$0xf]
          %v688 = vld [vmem:[#allocation11 + $0xa8] sm:$0xff]
          %v689 = vld [vmem:[#allocation11 + $0xb0] sm:$0xf]
          %v690 = vld [vmem:[#allocation11 + $0xb4] sm:$0xff]
          %v691 = vld [vmem:[#allocation11 + $0xbc] sm:$0xf]
          %v692 = vld [vmem:[%s5] sm:$0x7]
          %v725 = vunpack.c.l.b16 %v660
          %v726 = vunpack.c.h.b16 %v660
          %v727 = vunpack.c.l.b16 %v661
          %v728 = vunpack.c.l.b16 %v662
          %v729 = vunpack.c.h.b16 %v662
          %v730 = vunpack.c.l.b16 %v663
          %v731 = vunpack.c.l.b16 %v664
          %v732 = vunpack.c.h.b16 %v664
          %v733 = vunpack.c.l.b16 %v665
          %v734 = vunpack.c.l.b16 %v666
          %v735 = vunpack.c.h.b16 %v666
          %v736 = vunpack.c.l.b16 %v667
          %v737 = vunpack.c.l.b16 %v668
          %v738 = vunpack.c.h.b16 %v668
          %v739 = vunpack.c.l.b16 %v669
          %v740 = vunpack.c.l.b16 %v670
          %v741 = vunpack.c.h.b16 %v670
          %v742 = vunpack.c.l.b16 %v671
          %v743 = vunpack.c.l.b16 %v672
          %v744 = vunpack.c.h.b16 %v672
          %v745 = vunpack.c.l.b16 %v673
          %v746 = vunpack.c.l.b16 %v674
          %v747 = vunpack.c.h.b16 %v674
          %v748 = vunpack.c.l.b16 %v675
          %v749 = vunpack.c.l.b16 %v676
          %v750 = vunpack.c.h.b16 %v676
          %v751 = vunpack.c.l.b16 %v677
          %v752 = vunpack.c.l.b16 %v678
          %v753 = vunpack.c.h.b16 %v678
          %v754 = vunpack.c.l.b16 %v679
          %v755 = vunpack.c.l.b16 %v680
          %v756 = vunpack.c.h.b16 %v680
          %v757 = vunpack.c.l.b16 %v681
          %v758 = vunpack.c.l.b16 %v682
          %v759 = vunpack.c.h.b16 %v682
          %v760 = vunpack.c.l.b16 %v683
          %v761 = vunpack.c.l.b16 %v684
          %v762 = vunpack.c.h.b16 %v684
          %v763 = vunpack.c.l.b16 %v685
          %v764 = vunpack.c.l.b16 %v686
          %v765 = vunpack.c.h.b16 %v686
          %v766 = vunpack.c.l.b16 %v687
          %v767 = vunpack.c.l.b16 %v688
          %v768 = vunpack.c.h.b16 %v688
          %v769 = vunpack.c.l.b16 %v689
          %v770 = vunpack.c.l.b16 %v690
          %v771 = vunpack.c.h.b16 %v690
          %v772 = vunpack.c.l.b16 %v691
          %v773 = vpack.c.b16 %v728, %v725
          %v774 = vpack.c.b16 %v729, %v726
          %v775 = vpack.c.b16 %v730, %v727
          %v776 = vpack.c.b16 %v734, %v731
          %v777 = vpack.c.b16 %v735, %v732
          %v778 = vpack.c.b16 %v736, %v733
          %v779 = vpack.c.b16 %v740, %v737
          %v780 = vpack.c.b16 %v741, %v738
          %v781 = vpack.c.b16 %v742, %v739
          %v782 = vpack.c.b16 %v746, %v743
          %v783 = vpack.c.b16 %v747, %v744
          %v784 = vpack.c.b16 %v748, %v745
          %v785 = vpack.c.b16 %v752, %v749
          %v786 = vpack.c.b16 %v753, %v750
          %v787 = vpack.c.b16 %v754, %v751
          %v788 = vpack.c.b16 %v758, %v755
          %v789 = vpack.c.b16 %v759, %v756
          %v790 = vpack.c.b16 %v760, %v757
          %v791 = vpack.c.b16 %v764, %v761
          %v792 = vpack.c.b16 %v765, %v762
          %v793 = vpack.c.b16 %v766, %v763
          %v794 = vpack.c.b16 %v770, %v767
          %v795 = vpack.c.b16 %v771, %v768
          %v796 = vpack.c.b16 %v772, %v769
          %v822 = vlaneseq
          %v823 = vshrl.u32 %v822, 7
          %v824 = vsub.s32 0, %v823
          %v825 = vrot.slane %v692, %v824
          %v826 = vlaneseq
          %v827 = vshrl.u32 %v826, 7
          %v828 = vsub.s32 1, %v827
          %v829 = vrot.slane %v692, %v828
          %v830 = vlaneseq
          %v831 = vshrl.u32 %v830, 7
          %v832 = vsub.s32 2, %v831
          %v833 = vrot.slane %v692, %v832
          %837 = vmatprep.subr.bf16.mxu0 %v774
          %838 = vmatpush1.bf16.msra.mxu0 %v773
          %839 = vmatprep.subr.bf16.mxu0 %v777
          %840 = vmatpush1.bf16.msra.mxu0 %v776
          %841 = vmatprep.subr.bf16.mxu0 %v780
          %842 = vmatpush1.bf16.msra.mxu0 %v779
          %843 = vmatprep.subr.bf16.mxu0 %v783
          %844 = vmatpush1.bf16.msra.mxu0 %v782
          %845 = vmatprep.subr.bf16.mxu0 %v786
          %846 = vmatpush1.bf16.msra.mxu0 %v785
          %847 = vmatprep.subr.bf16.mxu0 %v789
          %848 = vmatpush1.bf16.msra.mxu0 %v788
          %849 = vmatprep.subr.bf16.mxu0 %v792
          %850 = vmatpush1.bf16.msra.mxu0 %v791
          %851 = vmatprep.subr.bf16.mxu0 %v795
          %852 = vmatpush1.bf16.msra.mxu0 %v794
          %853 = vmatprep.subr.bf16.mxu0 0
          %854 = vmatpush1.bf16.msra.mxu0 0
          %855 = vmatprep.subr.bf16.mxu0 0
          %856 = vmatpush1.bf16.msra.mxu0 0
          %857 = vmatprep.subr.bf16.mxu0 0
          %858 = vmatpush1.bf16.msra.mxu0 0
          %859 = vmatprep.subr.bf16.mxu0 0
          %860 = vmatpush1.bf16.msra.mxu0 0
          %861 = vmatprep.subr.bf16.mxu0 0
          %862 = vmatpush1.bf16.msra.mxu0 0
          %863 = vmatprep.subr.bf16.mxu0 0
          %864 = vmatpush1.bf16.msra.mxu0 0
          %865 = vmatprep.subr.bf16.mxu0 0
          %866 = vmatpush1.bf16.msra.mxu0 0
          %867 = vmatprep.subr.bf16.mxu0 0
          %868 = vmatpush1.bf16.msra.mxu0 0
          %869 = vmatprep.mubr.bf16.mxu0 0
          %870 = vmatmul.mubr.bf16.gmra.mrb[0].mxu0 %v659
          %v871 = vpop.f32.mrb[0].mxu0
          %v872 = vadd.f32 %v825, %v871
          %v873 = vpop.f32.mrb[0].mxu0
          %v874 = vadd.f32 %v829, %v873
          %v875 = vpop.f32.mrb[0].mxu0
          %v876 = vpop.f32.mrb[0].mxu0
          %877 = vdwg.mxu0
          %878 = vmatprep.subr.bf16.mxu0 0
          %879 = vmatpush1.bf16.msra.mxu0 %v775
          %880 = vmatprep.subr.bf16.mxu0 0
          %881 = vmatpush1.bf16.msra.mxu0 %v778
          %882 = vmatprep.subr.bf16.mxu0 0
          %883 = vmatpush1.bf16.msra.mxu0 %v781
          %884 = vmatprep.subr.bf16.mxu0 0
          %885 = vmatpush1.bf16.msra.mxu0 %v784
          %886 = vmatprep.subr.bf16.mxu0 0
          %887 = vmatpush1.bf16.msra.mxu0 %v787
          %888 = vmatprep.subr.bf16.mxu0 0
          %889 = vmatpush1.bf16.msra.mxu0 %v790
          %890 = vmatprep.subr.bf16.mxu0 0
          %891 = vmatpush1.bf16.msra.mxu0 %v793
          %892 = vmatprep.subr.bf16.mxu0 0
          %893 = vmatpush1.bf16.msra.mxu0 %v796
          %894 = vmatprep.subr.bf16.mxu0 0
          %895 = vmatpush1.bf16.msra.mxu0 0
          %896 = vmatprep.subr.bf16.mxu0 0
          %897 = vmatpush1.bf16.msra.mxu0 0
          %898 = vmatprep.subr.bf16.mxu0 0
          %899 = vmatpush1.bf16.msra.mxu0 0
          %900 = vmatprep.subr.bf16.mxu0 0
          %901 = vmatpush1.bf16.msra.mxu0 0
          %902 = vmatprep.subr.bf16.mxu0 0
          %903 = vmatpush1.bf16.msra.mxu0 0
          %904 = vmatprep.subr.bf16.mxu0 0
          %905 = vmatpush1.bf16.msra.mxu0 0
          %906 = vmatprep.subr.bf16.mxu0 0
          %907 = vmatpush1.bf16.msra.mxu0 0
          %908 = vmatprep.subr.bf16.mxu0 0
          %909 = vmatpush1.bf16.msra.mxu0 0
          %910 = vmatprep.mubr.bf16.mxu0 0
          %911 = vmatmul.mubr.bf16.gmra.mrb[0].mxu0 %v659
          %v912 = vpop.f32.mrb[0].mxu0
          %v913 = vadd.f32 %v833, %v912
          %v914 = vpop.f32.mrb[0].mxu0
          %v915 = vpop.f32.mrb[0].mxu0
          %v916 = vpop.f32.mrb[0].mxu0
          %917 = vdwg.mxu0
          %v918 = vadd.f32 %v613, %v872
          %v919 = vxor.u32 %v918, 2147483648
          %v920 = vmul.f32 %v919, 1.442695
          %v921 = vpow.pop %v920
          %v922 = vadd.f32 %v921, 1.0
          %v923 = vrcp.pop %v922
          %v924 = vmul.f32 1.0, %v923
          %v925 = vadd.f32 %v615, %v874
          %v926 = vxor.u32 %v925, 2147483648
          %v927 = vmul.f32 %v926, 1.442695
          %v928 = vpow.pop %v927
          %v929 = vadd.f32 %v928, 1.0
          %v930 = vrcp.pop %v929
          %v931 = vmul.f32 1.0, %v930
          %v932 = vmul.f32 %v924, %v913
          %v933 = vadd.f32 %v654, %v932
          %v934 = vtanh.pop %v933
          %v935 = vsub.f32 1.0, %v931
          %v936 = vmul.f32 %v935, %v934
          %v937 = vmul.f32 %v931, %v400
          %v938 = vadd.f32 %v936, %v937
          %939 = vst [vmem:[#allocation15] sm:$0x1] %v938
          %v940 = vpack.c.bf16 %v938, %v938
          %vm941 = vcmask 1040384
          %vm942 = vsmask.f32 256
          %vm943 = vmand %vm941, %vm942
          %v944 = vld [vmem:[#allocation2] sm:$0x1]
          %v945 = vsel %vm943, %v940, %v944
          %946 = vst [vmem:[#allocation2] sm:$0x1] %v945
          %vm947 = vcmask 0
          %948 = vst.msk [vmem:[#allocation4] sm:$0x1] %vm947, -inf
          %949 = vst.msk [vmem:[#allocation5] sm:$0x1] %vm947, 0.0
        $region72: #{tpu_custom_call.1} parent=51 // pred_fallthru
          _
        %v950 = vld [vmem:[#allocation2] sm:$0x1]
        %v951 = vld [vmem:[%s357] sm:$0xf]
        %v952 = vld [vmem:[%s357 + $0x4] sm:$0xf]
        %v953 = vld [vmem:[%s357 + $0x8] sm:$0xf]
        %v954 = vld [vmem:[%s357 + $0xc] sm:$0xf]
        %v955 = vld [vmem:[%s357 + $0x10] sm:$0xf]
        %v956 = vld [vmem:[%s357 + $0x14] sm:$0xf]
        %v957 = vld [vmem:[%s357 + $0x18] sm:$0xf]
        %v958 = vld [vmem:[%s357 + $0x1c] sm:$0xf]
        %v959 = vld [vmem:[%s357 + $0x20] sm:$0xf]
        %v960 = vld [vmem:[%s357 + $0x24] sm:$0xf]
        %v961 = vld [vmem:[%s357 + $0x28] sm:$0xf]
        %v962 = vld [vmem:[%s357 + $0x2c] sm:$0xf]
        %v963 = vld [vmem:[%s357 + $0x30] sm:$0xf]
        %v964 = vld [vmem:[%s357 + $0x34] sm:$0xf]
        %v965 = vld [vmem:[%s357 + $0x38] sm:$0xf]
        %v966 = vld [vmem:[%s357 + $0x3c] sm:$0xf]
        %v967 = vld [vmem:[%s392] sm:$0x1]
        %v984 = vunpack.c.l.b16 %v951
        %v985 = vunpack.c.l.b16 %v952
        %v986 = vunpack.c.l.b16 %v953
        %v987 = vunpack.c.l.b16 %v954
        %v988 = vunpack.c.l.b16 %v955
        %v989 = vunpack.c.l.b16 %v956
        %v990 = vunpack.c.l.b16 %v957
        %v991 = vunpack.c.l.b16 %v958
        %v992 = vunpack.c.l.b16 %v959
        %v993 = vunpack.c.l.b16 %v960
        %v994 = vunpack.c.l.b16 %v961
        %v995 = vunpack.c.l.b16 %v962
        %v996 = vunpack.c.l.b16 %v963
        %v997 = vunpack.c.l.b16 %v964
        %v998 = vunpack.c.l.b16 %v965
        %v999 = vunpack.c.l.b16 %v966
        %v1000 = vpack.c.b16 %v985, %v984
        %v1001 = vpack.c.b16 %v987, %v986
        %v1002 = vpack.c.b16 %v989, %v988
        %v1003 = vpack.c.b16 %v991, %v990
        %v1004 = vpack.c.b16 %v993, %v992
        %v1005 = vpack.c.b16 %v995, %v994
        %v1006 = vpack.c.b16 %v997, %v996
        %v1007 = vpack.c.b16 %v999, %v998
        %1016 = vmatprep.subr.bf16.mxu0 0
        %1017 = vmatpush1.bf16.msra.mxu0 %v1000
        %1018 = vmatprep.subr.bf16.mxu0 0
        %1019 = vmatpush1.bf16.msra.mxu0 %v1001
        %1020 = vmatprep.subr.bf16.mxu0 0
        %1021 = vmatpush1.bf16.msra.mxu0 %v1002
        %1022 = vmatprep.subr.bf16.mxu0 0
        %1023 = vmatpush1.bf16.msra.mxu0 %v1003
        %1024 = vmatprep.subr.bf16.mxu0 0
        %1025 = vmatpush1.bf16.msra.mxu0 %v1004
        %1026 = vmatprep.subr.bf16.mxu0 0
        %1027 = vmatpush1.bf16.msra.mxu0 %v1005
        %1028 = vmatprep.subr.bf16.mxu0 0
        %1029 = vmatpush1.bf16.msra.mxu0 %v1006
        %1030 = vmatprep.subr.bf16.mxu0 0
        %1031 = vmatpush1.bf16.msra.mxu0 %v1007
        %1032 = vmatprep.subr.bf16.mxu0 0
        %1033 = vmatpush1.bf16.msra.mxu0 0
        %1034 = vmatprep.subr.bf16.mxu0 0
        %1035 = vmatpush1.bf16.msra.mxu0 0
        %1036 = vmatprep.subr.bf16.mxu0 0
        %1037 = vmatpush1.bf16.msra.mxu0 0
        %1038 = vmatprep.subr.bf16.mxu0 0
        %1039 = vmatpush1.bf16.msra.mxu0 0
        %1040 = vmatprep.subr.bf16.mxu0 0
        %1041 = vmatpush1.bf16.msra.mxu0 0
        %1042 = vmatprep.subr.bf16.mxu0 0
        %1043 = vmatpush1.bf16.msra.mxu0 0
        %1044 = vmatprep.subr.bf16.mxu0 0
        %1045 = vmatpush1.bf16.msra.mxu0 0
        %1046 = vmatprep.subr.bf16.mxu0 0
        %1047 = vmatpush1.bf16.msra.mxu0 0
        %1048 = vmatprep.mubr.bf16.mxu0 0
        %1049 = vmatmul.mubr.bf16.gmra.mrb[0].mxu0 %v950
        %v1050 = vpop.f32.mrb[0].mxu0
        %v1051 = vadd.f32 %v967, %v1050
        %v1052 = vpop.f32.mrb[0].mxu0
        %v1053 = vpop.f32.mrb[0].mxu0
        %v1054 = vpop.f32.mrb[0].mxu0
        %1055 = vdwg.mxu0
        %s1056 = scalar_lea.vmem [#allocation3], %s28
        %1057 = vst [vmem:[%s1056] sm:$0x1] %v1051
        %v1058 = vld [vmem:[#allocation4] sm:$0x1]
        %vm1059 = vcmask 1040384
        %v1060 = vsel %vm1059, %v1051, -inf
        %1061 = vmax.xlane.f32.xlu0 %v1060
        %v1062 = vpop.xlane.xlu0 %1061
        %v1063 = vmax.f32 %v1058, %v1062
        %v1064 = vld [vmem:[#allocation5] sm:$0x1]
        %v1065 = vsub.f32 %v1058, %v1063
        %v1066 = vmul.f32 %v1065, 1.442695
        %v1067 = vpow.pop %v1066
        %v1068 = vmul.f32 %v1064, %v1067
        %1070 = vset.pattern.permute.xlu0 0
        %1071 = vperm.xlu0 %1070, %v1063
        %v1072 = vpop.permute.xlu0 %1071
        %v1074 = vlaneseq
        %v1075 = vshrl.u32 %v1074, 7
        %v1076 = vsub.s32 0, %v1075
        %v1077 = vrot.slane %v1072, %v1076
        %v1078 = vsub.f32 %v1051, %v1077
        %v1079 = vmul.f32 %v1078, 1.442695
        %v1080 = vpow.pop %v1079
        %v1081 = vsel %vm1059, %v1080, 0.0
        %1082 = vadd.xlane.f32.xlu0 %v1081
        %v1083 = vpop.xlane.xlu0 %1082
        %v1084 = vadd.f32 %v1068, %v1083
        %vm1085 = vcmask 0
        %1086 = vst.msk [vmem:[#allocation5] sm:$0x1] %vm1085, %v1084
        %1087 = vst.msk [vmem:[#allocation4] sm:$0x1] %vm1085, %v1063
        %p1088 = scmp.eq.s32.totalorder %s28, 2
        // Predicated region
        $region73: #{tpu_custom_call.1} parent=51 // pred_check
          %p1089 = pneg %p1088
        $region74: #{tpu_custom_call.1} parent=51 // pred_check_branch
          %1091 = sbr.rel (%p1089) target = $region76
        $region75: #{tpu_custom_call.1} parent=51 // pred_region
          %v1092 = vld [vmem:[#allocation4] sm:$0x1]
          %v1093 = vld [vmem:[#allocation5] sm:$0x1]
          %v1094 = vlog2.pop %v1093
          %v1095 = vmul.f32 %v1094, 0.6931472
          %v1096 = vadd.f32 %v1092, %v1095
          %v1097 = vld [vmem:[#allocation3] sm:$0x1]
          %1099 = vset.pattern.permute.xlu0 0
          %1100 = vperm.xlu0 %1099, %v1096
          %v1101 = vpop.permute.xlu0 %1100
          %v1103 = vlaneseq
          %v1104 = vshrl.u32 %v1103, 7
          %v1105 = vsub.s32 0, %v1104
          %v1106 = vrot.slane %v1101, %v1105
          %v1107 = vsub.f32 %v1097, %v1106
          %v1108 = vlaneseq
          %vm1109 = vcmp.ge.s32.totalorder %v1108, 0
          %vm1110 = vcmp.lt.s32.totalorder %v1108, 128
          %vm1111 = vmand %vm1109, %vm1110
          %1112 = vst.msk [vmem:[#allocation14] sm:$0x1] %vm1111, %v1107
          %s1113 = scalar_lea.vmem [#allocation3], 1
          %v1114 = vld [vmem:[%s1113] sm:$0x1]
          %v1115 = vsub.f32 %v1114, %v1106
          %1116 = vst.msk [vmem:[#allocation14 + $0x1] sm:$0x1] %vm1111, %v1115
          %s1117 = scalar_lea.vmem [#allocation3], 2
          %v1118 = vld [vmem:[%s1117] sm:$0x1]
          %v1119 = vsub.f32 %v1118, %v1106
          %1120 = vst.msk [vmem:[#allocation14 + $0x2] sm:$0x1] %vm1111, %v1119
        $region76: #{tpu_custom_call.1} parent=51 // pred_fallthru
          _
        // Predicated region
        $region77: #{tpu_custom_call.1} parent=51 // pred_check
          %p1121 = pneg %p219
        $region78: #{tpu_custom_call.1} parent=51 // pred_check_branch
          %1123 = sbr.rel (%p1121) target = $region80
        $region79: #{tpu_custom_call.1} parent=51 // pred_region
          %s1125 = ssub.s32 48, 48
          %1126 = vsyncadd [#allocation8], %s1125
          %s1128 = sshll.u32 [#allocation14], 4
          %s1129 = int_to_ptr.vmem [resolvable:$true] %s1128
          %1131 = dma.vmem_to_hbm [thread:$0]  %s1129, 48, %s8, [#allocation8]
        $region80: #{tpu_custom_call.1} parent=51 // pred_fallthru
          _
        // Predicated region
        $region81: #{tpu_custom_call.1} parent=51 // pred_check
          %p1132 = pneg %p240
        $region82: #{tpu_custom_call.1} parent=51 // pred_check_branch
          %1134 = sbr.rel (%p1132) target = $region84
        $region83: #{tpu_custom_call.1} parent=51 // pred_region
          %s1136 = ssub.s32 16, 16
          %1137 = vsyncadd [#allocation16], %s1136
          %s1139 = sshll.u32 [#allocation15], 4
          %s1140 = int_to_ptr.vmem [resolvable:$true] %s1139
          %1142 = dma.vmem_to_hbm [thread:$0]  %s1140, 16, %s9, [#allocation16]
        $region84: #{tpu_custom_call.1} parent=51 // pred_fallthru
          _
        // Predicated region
        $region85: #{tpu_custom_call.1} parent=51 // pred_check
          %p1143 = pneg %p219
        $region86: #{tpu_custom_call.1} parent=51 // pred_check_branch
          %1145 = sbr.rel (%p1143) target = $region88
        $region87: #{tpu_custom_call.1} parent=51 // pred_region
          %1146 = dma.done [#allocation8], 48
        $region88: #{tpu_custom_call.1} parent=51 // pred_fallthru
          _
        // Predicated region
        $region89: #{tpu_custom_call.1} parent=51 // pred_check
          %p1147 = pneg %p240
        $region90: #{tpu_custom_call.1} parent=51 // pred_check_branch
          %1149 = sbr.rel (%p1147) target = $region92
        $region91: #{tpu_custom_call.1} parent=51 // pred_region
          %1150 = dma.done [#allocation16], 16
        $region92: #{tpu_custom_call.1} parent=51 // pred_fallthru
          _
      $region52: #{tpu_custom_call.1} parent=5 // pred_fallthru
        _
      %p1151 = scmp.le.s32.totalorder 2, %s23
      // Predicated region
      $region93: #{tpu_custom_call.1} parent=5 // pred_check
        %p1152 = pneg %p1151
      $region94: #{tpu_custom_call.1} parent=5 // pred_check_branch
        %1154 = sbr.rel (%p1152) target = $region96
      $region95: #{tpu_custom_call.1} parent=5 // pred_region
        %s1155 = ssub.s32 %s23, 2
      $region96: #{tpu_custom_call.1} parent=5 // pred_fallthru
        _
    $region6: #{tpu_custom_call.1} parent=1 // loop_footer
      %s27 = sadd.s32 1, %s23
    $region7: #{tpu_custom_call.1} parent=1 // loop_footer_branch
      %22 = sbr.rel target = $region3
    $region8: #{tpu_custom_call.1} parent=1 // loop_exit
      _
    %1156 = vsyncpa [#allocation7], 1
    %s1157 = scalar_lea.sflag [#allocation7], 1
    %1158 = vsyncpa %s1157, 1
    %1159 = vsyncpa [#allocation10], 1
    %1160 = vsyncpa [#allocation13], 1
    %s1161 = scalar_lea.sflag [#allocation13], 1
    %1162 = vsyncpa %s1161, 1
    %1163 = vsyncpa [#allocation8], 1
    %s1164 = scalar_lea.sflag [#allocation8], 1
    %1165 = vsyncpa %s1164, 1
    %1166 = vsyncpa [#allocation16], 1

</llo_original>
